<compile_context>
chip_gen: v7x
topology: tpu7x:2x2x1
jax: 0.10.0
libtpu: 0.0.40
codegen_flags: <defaults>
</compile_context>

<pallas_src>
import functools

import jax
import jax.numpy as jnp
from jax.experimental import pallas as pl
from jax.experimental.pallas import tpu as pltpu


_LANE = 128
_VMEM_TILE_BUDGET = 20 * 1024 * 1024   # double-buffered operand working set
_VMEM_LIMIT_BYTES = 40 * 1024 * 1024   # scoped-VMEM limit (safe on v5e/v6e/v7x)


def _round_up(x, m):
    return (x + m - 1) // m * m


def _pick_tile(dim_padded, cap):
    """Largest multiple of 128 that divides dim_padded and is <= cap."""
    best = _LANE
    t = _LANE
    limit = min(cap, dim_padded)
    while t <= limit:
        if dim_padded % t == 0:
            best = t
        t += _LANE
    return best


def _pick_tile_below(dim_padded, cur):
    t = cur - _LANE
    while t > _LANE:
        if dim_padded % t == 0:
            return t
        t -= _LANE
    return _LANE


# --------------------------------------------------------------------------
# Pallas MXU matmul kernel: bf16 operands, f32 accumulation, fused
# scale/bias (+ optional residual add, optional ReLU) epilogue.
# --------------------------------------------------------------------------
def _mm_kernel(*refs, relu, has_res):
    if has_res:
        x_ref, w_ref, s_ref, b_ref, r_ref, o_ref, acc_ref = refs
    else:
        x_ref, w_ref, s_ref, b_ref, o_ref, acc_ref = refs
        r_ref = None
    k = pl.program_id(2)

    @pl.when(k == 0)
    def _():
        acc_ref[...] = jnp.zeros_like(acc_ref)

    acc_ref[...] += jnp.dot(x_ref[...], w_ref[...],
                            preferred_element_type=jnp.float32)

    @pl.when(k == pl.num_programs(2) - 1)
    def _():
        out = acc_ref[...] * s_ref[...] + b_ref[...]
        if has_res:
            out = out + r_ref[...].astype(jnp.float32)
        if relu:
            out = jnp.maximum(out, 0.0)
        o_ref[...] = out.astype(o_ref.dtype)


@functools.lru_cache(maxsize=None)
def _build_matmul(Mp, Kp, Np, tm, tk, tn, relu, has_res):
    # Grid: N-tiles leading (parallel -> split across TensorCores so each core
    # streams only its share of the weights), M-tiles second, K innermost.
    in_specs = [
        pl.BlockSpec((tm, tk), lambda j, i, k: (i, k)),   # activations (bf16)
        pl.BlockSpec((tk, tn), lambda j, i, k: (k, j)),   # pre-baked W (bf16)
        pl.BlockSpec((1, tn), lambda j, i, k: (0, j)),    # scale (f32)
        pl.BlockSpec((1, tn), lambda j, i, k: (0, j)),    # bias  (f32)
    ]
    if has_res:
        in_specs.append(pl.BlockSpec((tm, tn), lambda j, i, k: (i, j)))
    return pl.pallas_call(
        functools.partial(_mm_kernel, relu=relu, has_res=has_res),
        out_shape=jax.ShapeDtypeStruct((Mp, Np), jnp.bfloat16),
        grid_spec=pltpu.PrefetchScalarGridSpec(
            num_scalar_prefetch=0,
            grid=(Np // tn, Mp // tm, Kp // tk),
            in_specs=in_specs,
            out_specs=pl.BlockSpec((tm, tn), lambda j, i, k: (i, j)),
            scratch_shapes=[pltpu.VMEM((tm, tn), jnp.float32)],
        ),
        compiler_params=pltpu.CompilerParams(
            dimension_semantics=("parallel", "parallel", "arbitrary"),
            vmem_limit_bytes=_VMEM_LIMIT_BYTES),
    )


def _select_tiles(M, Kp, Np):
    Mp = _round_up(M, 16)                 # bf16 sublane tile
    if Mp <= 512:
        tm = Mp                           # single M tile: weights streamed once
    else:
        tm = 512                          # raises arithmetic intensity vs tm=256
        Mp = _round_up(M, tm)
    tk = _pick_tile(Kp, 1024)
    tn = _pick_tile(Np, 1024)

    def footprint(tk_, tn_):
        x2 = 2 * tm * tk_ * 2             # double-buffered bf16 activations
        w2 = 2 * tk_ * tn_ * 2            # double-buffered bf16 weights
        r2 = 2 * tm * tn_ * 2             # residual (worst case)
        o2 = 2 * tm * tn_ * 2             # output
        acc = tm * tn_ * 4                # f32 accumulator scratch
        sb = 4 * tn_ * 4 * 2              # scale / bias
        return x2 + w2 + r2 + o2 + acc + sb

    while footprint(tk, tn) > _VMEM_TILE_BUDGET and tk > _LANE:
        tk = _pick_tile_below(Kp, tk)
    while footprint(tk, tn) > _VMEM_TILE_BUDGET and tn > _LANE:
        tn = _pick_tile_below(Np, tn)
    return Mp, tm, tk, tn


def matmul_fused(cols, layer, relu=False, residual=None):
    """bf16 out = maybe_relu((cols @ W) * scale[col] + bias[col] [+ residual])."""
    M, Kp = cols.shape
    Np, cout = layer["Np"], layer["cout"]
    Mp, tm, tk, tn = _select_tiles(M, Kp, Np)
    if Mp != M:
        cols = jnp.pad(cols, ((0, Mp - M), (0, 0)))

    args = [cols, layer["w"], layer["s"], layer["b"]]
    has_res = residual is not None
    if has_res:
        # Residual is only read once per output tile (epilogue); kept bf16 to
        # match the bf16 inter-layer activation policy.
        rb = residual.astype(jnp.bfloat16)
        if rb.shape != (Mp, Np):
            rb = jnp.pad(rb, ((0, Mp - rb.shape[0]), (0, Np - rb.shape[1])))
        args.append(rb)

    out = _build_matmul(Mp, Kp, Np, tm, tk, tn, bool(relu), has_res)(*args)
    if (Mp, Np) != (M, cout):
        out = out[:M, :cout]
    return out


# --------------------------------------------------------------------------
# Pallas 2x2 max-pool: one contiguous read, one write.
# --------------------------------------------------------------------------
def _maxpool_kernel(x_ref, o_ref):
    v = x_ref[...]                               # (bm, 2, Wh, 2, C)
    m = jnp.maximum(v[:, 0], v[:, 1])            # reduce H pair  -> (bm, Wh, 2, C)
    o_ref[...] = jnp.max(m, axis=2)              # reduce W pair  -> (bm, Wh, C)


def maxpool2x2(x):  # NHWC, H and W even (nn.MaxPool2d(2, 2))
    N, H, W, C = x.shape
    Hh, Wh = H // 2, W // 2
    rows = N * Hh
    x5 = x.reshape(rows, 2, Wh, 2, C)            # free, contiguous reshape
    bm = min(rows, 128)
    rows_p = _round_up(rows, bm)
    if rows_p != rows:
        x5 = jnp.pad(x5, ((0, rows_p - rows), (0, 0), (0, 0), (0, 0), (0, 0)))
    out = pl.pallas_call(
        _maxpool_kernel,
        out_shape=jax.ShapeDtypeStruct((rows_p, Wh, C), x.dtype),
        grid=(rows_p // bm,),
        in_specs=[pl.BlockSpec((bm, 2, Wh, 2, C), lambda i: (i, 0, 0, 0, 0))],
        out_specs=pl.BlockSpec((bm, Wh, C), lambda i: (i, 0, 0)),
    )(x5)
    if rows_p != rows:
        out = out[:rows]
    return out.reshape(N, Hh, Wh, C)


# --------------------------------------------------------------------------
# Pallas elementwise add (decoder skip connections)
# --------------------------------------------------------------------------
def _add_kernel(a_ref, b_ref, o_ref):
    o_ref[...] = a_ref[...] + b_ref[...]


def p_add(a, b):
    """Lane-dense (rows, 1024) gridded elementwise add over flat arrays."""
    shape = a.shape
    dtype = a.dtype
    n = a.size
    L = 1024
    rows = -(-n // L)
    tile_r = min(_round_up(rows, 16), 256)
    rows_p = _round_up(rows, tile_r)
    flats = [jnp.pad(v.reshape(-1), (0, rows_p * L - n)).reshape(rows_p, L)
             for v in (a, b)]
    out = pl.pallas_call(
        _add_kernel,
        out_shape=jax.ShapeDtypeStruct((rows_p, L), dtype),
        grid=(rows_p // tile_r,),
        in_specs=[pl.BlockSpec((tile_r, L), lambda i: (i, 0))] * 2,
        out_specs=pl.BlockSpec((tile_r, L), lambda i: (i, 0)),
    )(*flats)
    return out.reshape(-1)[:n].reshape(shape)


# --------------------------------------------------------------------------
# JAX glue: im2col (K-padding fused into the concat), pixel shuffle, conv
# --------------------------------------------------------------------------
def im2col_kpad(x, kh, kw, stride, padding, dilation, Kp):
    """x: NHWC -> (N*Hout*Wout, Kp) patches (tap-major, channel-minor), padded."""
    N, H, W, C = x.shape
    xp = jnp.pad(x, ((0, 0), (padding, padding), (padding, padding), (0, 0)))
    Hout = (H + 2 * padding - dilation * (kh - 1) - 1) // stride + 1
    Wout = (W + 2 * padding - dilation * (kw - 1) - 1) // stride + 1
    cols = []
    for i in range(kh):
        for j in range(kw):
            sl = xp[:,
                    i * dilation: i * dilation + stride * (Hout - 1) + 1: stride,
                    j * dilation: j * dilation + stride * (Wout - 1) + 1: stride,
                    :]
            cols.append(sl)
    K = kh * kw * C
    if Kp > K:  # fold the 128-alignment padding into the same materialization
        cols.append(jnp.zeros((N, Hout, Wout, Kp - K), x.dtype))
    patches = jnp.concatenate(cols, axis=-1)
    return patches.reshape(N * Hout * Wout, Kp), (N, Hout, Wout)


def pixel_shuffle(x, r=2):  # NHWC, PyTorch channel ordering c*r*r + i*r + j
    N, H, W, C = x.shape
    c = C // (r * r)
    x = x.reshape(N, H, W, c, r, r)
    x = jnp.transpose(x, (0, 1, 4, 2, 5, 3))
    return x.reshape(N, H * r, W * r, c)


def conv2d(x, layer, *, relu=False, residual=None):
    """x: NHWC bf16; layer: pre-baked conv dict.  Returns NHWC bf16."""
    kh, kw = layer["kh"], layer["kw"]
    stride, padding, dilation = layer["stride"], layer["padding"], layer["dil"]
    cout, Kp = layer["cout"], layer["Kp"]
    if kh == 1 and kw == 1 and padding == 0:
        if stride != 1:
            x = x[:, ::stride, ::stride, :]
        N, Hout, Wout, C = x.shape
        cols = x.reshape(N * Hout * Wout, C)
        if Kp != C:
            cols = jnp.pad(cols, ((0, 0), (0, Kp - C)))
    else:
        cols, (N, Hout, Wout) = im2col_kpad(x, kh, kw, stride, padding,
                                            dilation, Kp)
    res2d = residual.reshape(-1, cout) if residual is not None else None
    out = matmul_fused(cols, layer, relu=relu, residual=res2d)
    return out.reshape(N, Hout, Wout, cout)


# --------------------------------------------------------------------------
# Deterministic parameter generation + offline weight baking
# --------------------------------------------------------------------------
class ParamGen:
    def __init__(self, seed=0):
        self.key = jax.random.PRNGKey(seed)

    def _next(self):
        self.key, sub = jax.random.split(self.key)
        return sub

    def conv(self, cout, cin, kh, kw):
        fan_in = cin * kh * kw
        std = (2.0 / fan_in) ** 0.5
        w = std * jax.random.normal(self._next(), (cout, cin, kh, kw),
                                    jnp.float32)
        return w.astype(jnp.bfloat16)

    def bn(self, c, eps=1e-5):
        gamma = 1.0 + 0.1 * jax.random.normal(self._next(), (c,), jnp.float32)
        beta = 0.1 * jax.random.normal(self._next(), (c,), jnp.float32)
        mean = 0.1 * jax.random.normal(self._next(), (c,), jnp.float32)
        var = jnp.abs(1.0 + 0.1 * jax.random.normal(self._next(), (c,),
                                                    jnp.float32))
        s = gamma / jnp.sqrt(var + eps)
        b = beta - mean * s
        return s, b

    def bias(self, c):
        return 0.1 * jax.random.normal(self._next(), (c,), jnp.float32)


def bake_conv(w_oihw, scale=None, bias=None, *, stride=1, padding=0, dilation=1):
    """Pre-bake a conv layer: (K, N) bf16 weight matrix padded to 128-aligned
    (Kp, Np), plus padded (1, Np) f32 scale/bias.  Done once, offline."""
    cout, cin, kh, kw = w_oihw.shape
    K = kh * kw * cin
    Kp = _round_up(K, _LANE)
    Np = _round_up(cout, _LANE)
    wmat = jnp.transpose(w_oihw.astype(jnp.bfloat16), (2, 3, 1, 0))
    wmat = wmat.reshape(K, cout)
    wmat = jnp.pad(wmat, ((0, Kp - K), (0, Np - cout)))
    if scale is None:
        scale = jnp.ones((cout,), jnp.float32)
    if bias is None:
        bias = jnp.zeros((cout,), jnp.float32)
    s = jnp.pad(scale.astype(jnp.float32).reshape(1, cout),
                ((0, 0), (0, Np - cout)))
    b = jnp.pad(bias.astype(jnp.float32).reshape(1, cout),
                ((0, 0), (0, Np - cout)))
    return {"w": wmat, "s": s, "b": b, "kh": kh, "kw": kw, "cin": cin,
            "cout": cout, "Kp": Kp, "Np": Np,
            "stride": stride, "padding": padding, "dil": dilation}


def make_res_block_params(pg, cin, c, stride, dilation=1):
    pad = dilation  # _conv3x3: padding = 1 + dilation - 1
    s1, b1 = pg.bn(c)
    s2, b2 = pg.bn(c)
    p = {"conv1": bake_conv(pg.conv(c, cin, 3, 3), s1, b1,
                            stride=stride, padding=pad, dilation=dilation),
         "conv2": bake_conv(pg.conv(c, c, 3, 3), s2, b2,
                            stride=1, padding=pad, dilation=dilation)}
    if cin != c:
        ss, bs = pg.bn(c)
        p["short"] = bake_conv(pg.conv(c, cin, 1, 1), ss, bs, stride=stride)
    return p


def make_rb_params(pg, cin, c):
    s, b = pg.bn(c)
    return {"conv1x1": bake_conv(pg.conv(c, cin, 1, 1)),
            "conv3a": bake_conv(pg.conv(c, c, 3, 3), s, b, padding=1),
            "conv3b": bake_conv(pg.conv(c, c, 3, 3), padding=1)}


def make_pros_params(in_channels, seed=0):
    pg = ParamGen(seed)
    P = {}
    s, b = pg.bn(64)
    P["stem"] = bake_conv(pg.conv(64, in_channels, 7, 7), s, b,
                          stride=2, padding=3)
    P["res_1"] = [make_res_block_params(pg, 64, 256, 1),
                  make_res_block_params(pg, 256, 256, 1)]
    P["res_2"] = [make_res_block_params(pg, 256, 512, 2),
                  make_res_block_params(pg, 512, 512, 1)]
    P["res_3"] = [make_res_block_params(pg, 512, 1024, 1, 2),
                  make_res_block_params(pg, 1024, 1024, 1, 2)]
    P["res_4"] = [make_res_block_params(pg, 1024, 2048, 1, 4),
                  make_res_block_params(pg, 2048, 2048, 1, 4)]
    P["rb_128"] = make_rb_params(pg, 256, 128)
    P["rb_512"] = make_rb_params(pg, 2048, 512)
    P["rb_32"] = make_rb_params(pg, 64, 32)
    P["rb_128b"] = make_rb_params(pg, 128, 128)
    P["rb_8"] = make_rb_params(pg, 32, 8)
    P["fc"] = bake_conv(pg.conv(1, 2, 1, 1), bias=pg.bias(1))
    return P


# --------------------------------------------------------------------------
# Model blocks (residual add + final ReLU fused into the last conv's epilogue)
# --------------------------------------------------------------------------
def res_block(x, p):
    out = conv2d(x, p["conv1"], relu=True)
    if "short" in p:
        sc = conv2d(x, p["short"], relu=False)
    else:
        sc = x
    return conv2d(out, p["conv2"], relu=True, residual=sc)


def refinement_block(x, p):
    out1 = conv2d(x, p["conv1x1"])
    out3 = conv2d(out1, p["conv3a"], relu=True)
    return conv2d(out3, p["conv3b"], relu=True, residual=out1)


def pros_forward(x_nchw, P):
    x = jnp.transpose(x_nchw, (0, 2, 3, 1)).astype(jnp.bfloat16)  # -> NHWC

    stem = conv2d(x, P["stem"], relu=True)

    r1 = maxpool2x2(stem)
    for p in P["res_1"]:
        r1 = res_block(r1, p)

    r = r1
    for p in P["res_2"] + P["res_3"] + P["res_4"]:
        r = res_block(r, p)

    d1 = refinement_block(r1, P["rb_128"])
    d1 = p_add(d1, pixel_shuffle(refinement_block(r, P["rb_512"]), 2))

    d2 = pixel_shuffle(refinement_block(d1, P["rb_128b"]), 2)
    d2 = p_add(d2, refinement_block(stem, P["rb_32"]))

    out = pixel_shuffle(refinement_block(d2, P["rb_8"]), 2)
    out = conv2d(out, P["fc"])                    # 1x1, with bias
    return out[..., 0].astype(jnp.float32)        # squeeze channel -> (N, H, W)


# --------------------------------------------------------------------------
if __name__ == "__main__":
    in_channels = 3
    N, H, W = 2, 16, 16  # spatial must be divisible by 8 (stride2 + pool + stride2)

    key = jax.random.PRNGKey(0)
    x = jax.random.normal(key, (N, in_channels, H, W), jnp.float32)  # NCHW

    params = make_pros_params(in_channels, seed=0)

    out = pros_forward(x, params)
    out = jax.block_until_ready(out)

    assert out.shape == (N, H, W), out.shape
    assert bool(jnp.all(jnp.isfinite(out)))
    print("KERNEL_OK")
</pallas_src>

<mosaic_0001>
module attributes {stable_mosaic.version = 11 : i64} {
  func.func @_mm_kernel(%arg0: i32, %arg1: i32, %arg2: i32, %arg3: memref<128x256xbf16, #tpu.memory_space<vmem>>, %arg4: memref<256x128xbf16, #tpu.memory_space<vmem>>, %arg5: memref<1x128xf32, #tpu.memory_space<vmem>>, %arg6: memref<1x128xf32, #tpu.memory_space<vmem>>, %arg7: memref<128x128xbf16, #tpu.memory_space<vmem>>, %arg8: memref<128x128xf32, #tpu.memory_space<vmem>>) attributes {dimension_semantics = [#tpu.dimension_semantics<parallel>, #tpu.dimension_semantics<parallel>, #tpu.dimension_semantics<arbitrary>], iteration_bounds = array<i64: 1, 1, 1>, scalar_prefetch = 0 : i64, scratch_operands = 1 : i64, tpu.core_type = #tpu.core_type<tc>, window_params = [{transform_indices = @transform_0, window_bounds = array<i64: 128, 256>}, {transform_indices = @transform_1, window_bounds = array<i64: 256, 128>}, {transform_indices = @transform_2, window_bounds = array<i64: 1, 128>}, {transform_indices = @transform_3, window_bounds = array<i64: 1, 128>}, {transform_indices = @transform_4, window_bounds = array<i64: 128, 128>}]} {
    %c0_i32 = arith.constant 0 : i32
    %0 = arith.cmpi eq, %arg2, %c0_i32 : i32
    %1 = arith.extui %0 : i1 to i32
    %c0_i32_0 = arith.constant 0 : i32
    %2 = arith.cmpi ne, %1, %c0_i32_0 : i32
    scf.if %2 {
      %cst_10 = arith.constant 0.000000e+00 : f32
      %12 = vector.broadcast %cst_10 : f32 to vector<128x128xf32>
      %c0_11 = arith.constant 0 : index
      %c0_12 = arith.constant 0 : index
      %13 = vector.load %arg8[%c0_11, %c0_12] : memref<128x128xf32, #tpu.memory_space<vmem>>, vector<128x128xf32>
      tpu.vector_store %arg8[%c0_11, %c0_12], %12 {strides = array<i32>} : memref<128x128xf32, #tpu.memory_space<vmem>>, vector<128x128xf32>,
    } else {
    }
    %c0 = arith.constant 0 : index
    %c0_1 = arith.constant 0 : index
    %3 = vector.load %arg8[%c0, %c0_1] : memref<128x128xf32, #tpu.memory_space<vmem>>, vector<128x128xf32>
    %c0_2 = arith.constant 0 : index
    %c0_3 = arith.constant 0 : index
    %4 = vector.load %arg3[%c0_2, %c0_3] : memref<128x256xbf16, #tpu.memory_space<vmem>>, vector<128x256xbf16>
    %c0_4 = arith.constant 0 : index
    %c0_5 = arith.constant 0 : index
    %5 = vector.load %arg4[%c0_4, %c0_5] : memref<256x128xbf16, #tpu.memory_space<vmem>>, vector<256x128xbf16>
    %cst = arith.constant dense<0.000000e+00> : vector<128x128xf32>
    %6 = tpu.matmul %4, %5, %cst {dimension_numbers = #tpu.dot_dimension_numbers<[1], [0], [0], [1], [0, 0, 1, 1], [], []>} : vector<128x256xbf16>, vector<256x128xbf16>, vector<128x128xf32> -> vector<128x128xf32>
    %7 = arith.addf %3, %6 : vector<128x128xf32>
    %c0_6 = arith.constant 0 : index
    %c0_7 = arith.constant 0 : index
    %8 = vector.load %arg8[%c0_6, %c0_7] : memref<128x128xf32, #tpu.memory_space<vmem>>, vector<128x128xf32>
    tpu.vector_store %arg8[%c0_6, %c0_7], %7 {strides = array<i32>} : memref<128x128xf32, #tpu.memory_space<vmem>>, vector<128x128xf32>,
    %c0_i32_8 = arith.constant 0 : i32
    %9 = arith.cmpi eq, %arg2, %c0_i32_8 : i32
    %10 = arith.extui %9 : i1 to i32
    %c0_i32_9 = arith.constant 0 : i32
    %11 = arith.cmpi ne, %10, %c0_i32_9 : i32
    scf.if %11 {
      %c0_10 = arith.constant 0 : index
      %c0_11 = arith.constant 0 : index
      %12 = vector.load %arg8[%c0_10, %c0_11] : memref<128x128xf32, #tpu.memory_space<vmem>>, vector<128x128xf32>
      %c0_12 = arith.constant 0 : index
      %c0_13 = arith.constant 0 : index
      %13 = vector.load %arg5[%c0_12, %c0_13] : memref<1x128xf32, #tpu.memory_space<vmem>>, vector<1x128xf32>
      %14 = vector.broadcast %13 : vector<1x128xf32> to vector<128x128xf32>
      %15 = arith.mulf %12, %14 : vector<128x128xf32>
      %c0_14 = arith.constant 0 : index
      %c0_15 = arith.constant 0 : index
      %16 = vector.load %arg6[%c0_14, %c0_15] : memref<1x128xf32, #tpu.memory_space<vmem>>, vector<1x128xf32>
      %17 = vector.broadcast %16 : vector<1x128xf32> to vector<128x128xf32>
      %18 = arith.addf %15, %17 : vector<128x128xf32>
      %cst_16 = arith.constant 0.000000e+00 : f32
      %19 = vector.broadcast %cst_16 : f32 to vector<128x128xf32>
      %20 = arith.maximumf %18, %19 : vector<128x128xf32>
      %21 = arith.truncf %20 : vector<128x128xf32> to vector<128x128xbf16>
      %c0_17 = arith.constant 0 : index
      %c0_18 = arith.constant 0 : index
      %22 = vector.load %arg7[%c0_17, %c0_18] : memref<128x128xbf16, #tpu.memory_space<vmem>>, vector<128x128xbf16>
      tpu.vector_store %arg7[%c0_17, %c0_18], %21 {strides = array<i32>} : memref<128x128xbf16, #tpu.memory_space<vmem>>, vector<128x128xbf16>,
    } else {
    }
    return
  }
  func.func @transform_0(%arg0: i32, %arg1: i32, %arg2: i32) -> (i32, i32) {
    %c0_i32 = arith.constant 0 : i32
    return %arg1, %arg2 : i32, i32
  }
  func.func @transform_1(%arg0: i32, %arg1: i32, %arg2: i32) -> (i32, i32) {
    %c0_i32 = arith.constant 0 : i32
    return %arg2, %arg0 : i32, i32
  }
  func.func @transform_2(%arg0: i32, %arg1: i32, %arg2: i32) -> (i32, i32) {
    %c0_i32 = arith.constant 0 : i32
    %c0_i32_0 = arith.constant 0 : i32
    return %c0_i32, %arg0 : i32, i32
  }
  func.func @transform_3(%arg0: i32, %arg1: i32, %arg2: i32) -> (i32, i32) {
    %c0_i32 = arith.constant 0 : i32
    %c0_i32_0 = arith.constant 0 : i32
    return %c0_i32, %arg0 : i32, i32
  }
  func.func @transform_4(%arg0: i32, %arg1: i32, %arg2: i32) -> (i32, i32) {
    %c0_i32 = arith.constant 0 : i32
    return %arg1, %arg0 : i32, i32
  }
}

</mosaic_0001>

<llo_original>
// kernel: tpu_custom_call.1
$region0: #{tpu_custom_call.1}
  #allocation0 [shape = 'u32[]', space=smem, size = 0x4, offset = 0x4, fixed_abs, tag = 'smem constant byte address 0x4 - core index']
  #allocation1 [shape = 'u32[144,128]{1,0:T(1,128)}', space=vmem, size = 0x12000, scoped, tag = 'internal scratch']
  #allocation2 [shape = 'f32[128,128]{1,0:T(8,128)}', space=vmem, size = 0x10000, scoped, tag = 'scratch operand']
  %s0 = inlined_call_operand.hbm [shape: bf16[128,256], index: 0, kind: input, shape index: {}]
  %s1 = inlined_call_operand.hbm [shape: bf16[256,128], index: 1, kind: input, shape index: {}]
  %s2 = inlined_call_operand.vmem [shape: f32[1,128], index: 2, kind: input, shape index: {}]
  %s3 = inlined_call_operand.vmem [shape: f32[1,128], index: 3, kind: input, shape index: {}]
  %s4 = inlined_call_operand.hbm [shape: bf16[128,128], index: 4, kind: output, shape index: {}]
  %s5 = sld [smem:[#allocation0]]
  $region42: #{tpu_custom_call.1} parent=0
    _
  %s7 = ssub.s32 1, %s5
  %s8 = scalar_select 0, %s7, %s5
  $region1: #{tpu_custom_call.1} parent=0
    #allocation3 [shape = 'u8[65536]{0}', space=vmem, size = 0x10000, scoped, tag = 'input window, operand 0, single buffered']
    #allocation4 [shape = 's32[1]{0}', space=sflag, size = 0x4, scoped, tag = 'scoped memory for tpu_custom_call.1']
    #allocation5 [shape = 's32[1]{0}', space=sflag, size = 0x4, scoped, tag = 'scoped memory for tpu_custom_call.1']
    #allocation6 [shape = 'u8[65536]{0}', space=vmem, size = 0x10000, scoped, tag = 'input window, operand 1, single buffered']
    #allocation7 [shape = 's32[1]{0}', space=sflag, size = 0x4, scoped, tag = 'scoped memory for tpu_custom_call.1']
    #allocation8 [shape = 'u8[32768]{0}', space=vmem, size = 0x8000, scoped, tag = 'output window, operand 0, single buffered']
    %9 = vsyncpa [#allocation4], 0
    %10 = vsyncpa [#allocation7], 0
    %11 = vsyncpa [#allocation5], 0
    // Predicated region
    $region2: #{tpu_custom_call.1} parent=1 // pred_check
      _
    $region3: #{tpu_custom_call.1} parent=1 // pred_check_branch
      %13 = sbr.rel (0) target = $region5
    $region4: #{tpu_custom_call.1} parent=1 // pred_region
      %s15 = ssub.s32 2048, 2048
      %16 = vsyncadd [#allocation4], %s15
      %s17 = sshll.u32 [#allocation3], 4
      %s18 = int_to_ptr.vmem [resolvable:$true] %s17
      %23 = dma.hbm_to_vmem [thread:$0]  %s0, 2048, %s18, [#allocation4], 128, 128, 8
    $region5: #{tpu_custom_call.1} parent=1 // pred_fallthru
      _
    // Predicated region
    $region6: #{tpu_custom_call.1} parent=1 // pred_check
      _
    $region7: #{tpu_custom_call.1} parent=1 // pred_check_branch
      %25 = sbr.rel (0) target = $region9
    $region8: #{tpu_custom_call.1} parent=1 // pred_region
      %s27 = ssub.s32 2048, 2048
      %28 = vsyncadd [#allocation7], %s27
      %s29 = sshll.u32 [#allocation6], 4
      %s30 = int_to_ptr.vmem [resolvable:$true] %s29
      %35 = dma.hbm_to_vmem [thread:$0]  %s1, 2048, %s30, [#allocation7], 64, 64, 4
    $region9: #{tpu_custom_call.1} parent=1 // pred_fallthru
      _
    // Predicated region
    $region10: #{tpu_custom_call.1} parent=1 // pred_check
      _
    $region11: #{tpu_custom_call.1} parent=1 // pred_check_branch
      %37 = sbr.rel (0) target = $region13
    $region12: #{tpu_custom_call.1} parent=1 // pred_region
      _
    $region13: #{tpu_custom_call.1} parent=1 // pred_fallthru
      _
    // Predicated region
    $region14: #{tpu_custom_call.1} parent=1 // pred_check
      _
    $region15: #{tpu_custom_call.1} parent=1 // pred_check_branch
      %39 = sbr.rel (0) target = $region17
    $region16: #{tpu_custom_call.1} parent=1 // pred_region
      _
    $region17: #{tpu_custom_call.1} parent=1 // pred_fallthru
      _
    // Predicated region
    $region18: #{tpu_custom_call.1} parent=1 // pred_check
      _
    $region19: #{tpu_custom_call.1} parent=1 // pred_check_branch
      %41 = sbr.rel (0) target = $region21
    $region20: #{tpu_custom_call.1} parent=1 // pred_region
      %42 = dma.done [#allocation4], 2048
    $region21: #{tpu_custom_call.1} parent=1 // pred_fallthru
      _
    // Predicated region
    $region22: #{tpu_custom_call.1} parent=1 // pred_check
      _
    $region23: #{tpu_custom_call.1} parent=1 // pred_check_branch
      %44 = sbr.rel (0) target = $region25
    $region24: #{tpu_custom_call.1} parent=1 // pred_region
      %45 = dma.done [#allocation7], 2048
    $region25: #{tpu_custom_call.1} parent=1 // pred_fallthru
      _
    %p47 = scmp.eq.s32.totalorder 0, 0
    // Predicated region
    $region26: #{tpu_custom_call.1} parent=1 // pred_check
      %p48 = pneg %p47
    $region27: #{tpu_custom_call.1} parent=1 // pred_check_branch
      %50 = sbr.rel (%p48) target = $region29
    $region28: #{tpu_custom_call.1} parent=1 // pred_region
      %51 = vst [vmem:[#allocation2] sm:$0xff] 0.0
      %52 = vst [vmem:[#allocation2 + $0x8] sm:$0xff] 0.0
      %53 = vst [vmem:[#allocation2 + $0x10] sm:$0xff] 0.0
      %54 = vst [vmem:[#allocation2 + $0x18] sm:$0xff] 0.0
      %55 = vst [vmem:[#allocation2 + $0x20] sm:$0xff] 0.0
      %56 = vst [vmem:[#allocation2 + $0x28] sm:$0xff] 0.0
      %57 = vst [vmem:[#allocation2 + $0x30] sm:$0xff] 0.0
      %58 = vst [vmem:[#allocation2 + $0x38] sm:$0xff] 0.0
      %59 = vst [vmem:[#allocation2 + $0x40] sm:$0xff] 0.0
      %60 = vst [vmem:[#allocation2 + $0x48] sm:$0xff] 0.0
      %61 = vst [vmem:[#allocation2 + $0x50] sm:$0xff] 0.0
      %62 = vst [vmem:[#allocation2 + $0x58] sm:$0xff] 0.0
      %63 = vst [vmem:[#allocation2 + $0x60] sm:$0xff] 0.0
      %64 = vst [vmem:[#allocation2 + $0x68] sm:$0xff] 0.0
      %65 = vst [vmem:[#allocation2 + $0x70] sm:$0xff] 0.0
      %66 = vst [vmem:[#allocation2 + $0x78] sm:$0xff] 0.0
    $region29: #{tpu_custom_call.1} parent=1 // pred_fallthru
      _
    %v67 = vld [vmem:[#allocation2] sm:$0xff]
    %v68 = vld [vmem:[#allocation2 + $0x8] sm:$0xff]
    %v69 = vld [vmem:[#allocation2 + $0x10] sm:$0xff]
    %v70 = vld [vmem:[#allocation2 + $0x18] sm:$0xff]
    %v71 = vld [vmem:[#allocation2 + $0x20] sm:$0xff]
    %v72 = vld [vmem:[#allocation2 + $0x28] sm:$0xff]
    %v73 = vld [vmem:[#allocation2 + $0x30] sm:$0xff]
    %v74 = vld [vmem:[#allocation2 + $0x38] sm:$0xff]
    %v75 = vld [vmem:[#allocation2 + $0x40] sm:$0xff]
    %v76 = vld [vmem:[#allocation2 + $0x48] sm:$0xff]
    %v77 = vld [vmem:[#allocation2 + $0x50] sm:$0xff]
    %v78 = vld [vmem:[#allocation2 + $0x58] sm:$0xff]
    %v79 = vld [vmem:[#allocation2 + $0x60] sm:$0xff]
    %v80 = vld [vmem:[#allocation2 + $0x68] sm:$0xff]
    %v81 = vld [vmem:[#allocation2 + $0x70] sm:$0xff]
    %v82 = vld [vmem:[#allocation2 + $0x78] sm:$0xff]
    %v83 = vld [vmem:[#allocation3] sm:$0xff]
    %v84 = vld [vmem:[#allocation3 + $0x8] sm:$0xff]
    %v85 = vld [vmem:[#allocation3 + $0x10] sm:$0xff]
    %v86 = vld [vmem:[#allocation3 + $0x18] sm:$0xff]
    %v87 = vld [vmem:[#allocation3 + $0x20] sm:$0xff]
    %v88 = vld [vmem:[#allocation3 + $0x28] sm:$0xff]
    %v89 = vld [vmem:[#allocation3 + $0x30] sm:$0xff]
    %v90 = vld [vmem:[#allocation3 + $0x38] sm:$0xff]
    %v91 = vld [vmem:[#allocation3 + $0x40] sm:$0xff]
    %v92 = vld [vmem:[#allocation3 + $0x48] sm:$0xff]
    %v93 = vld [vmem:[#allocation3 + $0x50] sm:$0xff]
    %v94 = vld [vmem:[#allocation3 + $0x58] sm:$0xff]
    %v95 = vld [vmem:[#allocation3 + $0x60] sm:$0xff]
    %v96 = vld [vmem:[#allocation3 + $0x68] sm:$0xff]
    %v97 = vld [vmem:[#allocation3 + $0x70] sm:$0xff]
    %v98 = vld [vmem:[#allocation3 + $0x78] sm:$0xff]
    %v99 = vld [vmem:[#allocation6] sm:$0xf]
    %v100 = vld [vmem:[#allocation6 + $0x4] sm:$0xf]
    %v101 = vld [vmem:[#allocation6 + $0x8] sm:$0xf]
    %v102 = vld [vmem:[#allocation6 + $0xc] sm:$0xf]
    %v103 = vld [vmem:[#allocation6 + $0x10] sm:$0xf]
    %v104 = vld [vmem:[#allocation6 + $0x14] sm:$0xf]
    %v105 = vld [vmem:[#allocation6 + $0x18] sm:$0xf]
    %v106 = vld [vmem:[#allocation6 + $0x1c] sm:$0xf]
    %v107 = vld [vmem:[#allocation6 + $0x20] sm:$0xf]
    %v108 = vld [vmem:[#allocation6 + $0x24] sm:$0xf]
    %v109 = vld [vmem:[#allocation6 + $0x28] sm:$0xf]
    %v110 = vld [vmem:[#allocation6 + $0x2c] sm:$0xf]
    %v111 = vld [vmem:[#allocation6 + $0x30] sm:$0xf]
    %v112 = vld [vmem:[#allocation6 + $0x34] sm:$0xf]
    %v113 = vld [vmem:[#allocation6 + $0x38] sm:$0xf]
    %v114 = vld [vmem:[#allocation6 + $0x3c] sm:$0xf]
    %v115 = vld [vmem:[#allocation6 + $0x40] sm:$0xf]
    %v116 = vld [vmem:[#allocation6 + $0x44] sm:$0xf]
    %v117 = vld [vmem:[#allocation6 + $0x48] sm:$0xf]
    %v118 = vld [vmem:[#allocation6 + $0x4c] sm:$0xf]
    %v119 = vld [vmem:[#allocation6 + $0x50] sm:$0xf]
    %v120 = vld [vmem:[#allocation6 + $0x54] sm:$0xf]
    %v121 = vld [vmem:[#allocation6 + $0x58] sm:$0xf]
    %v122 = vld [vmem:[#allocation6 + $0x5c] sm:$0xf]
    %v123 = vld [vmem:[#allocation6 + $0x60] sm:$0xf]
    %v124 = vld [vmem:[#allocation6 + $0x64] sm:$0xf]
    %v125 = vld [vmem:[#allocation6 + $0x68] sm:$0xf]
    %v126 = vld [vmem:[#allocation6 + $0x6c] sm:$0xf]
    %v127 = vld [vmem:[#allocation6 + $0x70] sm:$0xf]
    %v128 = vld [vmem:[#allocation6 + $0x74] sm:$0xf]
    %v129 = vld [vmem:[#allocation6 + $0x78] sm:$0xf]
    %v130 = vld [vmem:[#allocation6 + $0x7c] sm:$0xf]
    %v147 = vunpack.c.l.b16 %v83
    %v148 = vunpack.c.h.b16 %v83
    %v149 = vunpack.c.l.b16 %v84
    %v150 = vunpack.c.h.b16 %v84
    %v151 = vunpack.c.l.b16 %v85
    %v152 = vunpack.c.h.b16 %v85
    %v153 = vunpack.c.l.b16 %v86
    %v154 = vunpack.c.h.b16 %v86
    %v155 = vunpack.c.l.b16 %v87
    %v156 = vunpack.c.h.b16 %v87
    %v157 = vunpack.c.l.b16 %v88
    %v158 = vunpack.c.h.b16 %v88
    %v159 = vunpack.c.l.b16 %v89
    %v160 = vunpack.c.h.b16 %v89
    %v161 = vunpack.c.l.b16 %v90
    %v162 = vunpack.c.h.b16 %v90
    %v163 = vunpack.c.l.b16 %v91
    %v164 = vunpack.c.h.b16 %v91
    %v165 = vunpack.c.l.b16 %v92
    %v166 = vunpack.c.h.b16 %v92
    %v167 = vunpack.c.l.b16 %v93
    %v168 = vunpack.c.h.b16 %v93
    %v169 = vunpack.c.l.b16 %v94
    %v170 = vunpack.c.h.b16 %v94
    %v171 = vunpack.c.l.b16 %v95
    %v172 = vunpack.c.h.b16 %v95
    %v173 = vunpack.c.l.b16 %v96
    %v174 = vunpack.c.h.b16 %v96
    %v175 = vunpack.c.l.b16 %v97
    %v176 = vunpack.c.h.b16 %v97
    %v177 = vunpack.c.l.b16 %v98
    %v178 = vunpack.c.h.b16 %v98
    %v179 = vpack.c.b16 %v149, %v147
    %v180 = vpack.c.b16 %v150, %v148
    %v181 = vpack.c.b16 %v153, %v151
    %v182 = vpack.c.b16 %v154, %v152
    %v183 = vpack.c.b16 %v157, %v155
    %v184 = vpack.c.b16 %v158, %v156
    %v185 = vpack.c.b16 %v161, %v159
    %v186 = vpack.c.b16 %v162, %v160
    %v187 = vpack.c.b16 %v165, %v163
    %v188 = vpack.c.b16 %v166, %v164
    %v189 = vpack.c.b16 %v169, %v167
    %v190 = vpack.c.b16 %v170, %v168
    %v191 = vpack.c.b16 %v173, %v171
    %v192 = vpack.c.b16 %v174, %v172
    %v193 = vpack.c.b16 %v177, %v175
    %v194 = vpack.c.b16 %v178, %v176
    %v243 = vunpack.c.l.b16 %v99
    %v244 = vunpack.c.l.b16 %v100
    %v245 = vunpack.c.l.b16 %v101
    %v246 = vunpack.c.l.b16 %v102
    %v247 = vunpack.c.l.b16 %v103
    %v248 = vunpack.c.l.b16 %v104
    %v249 = vunpack.c.l.b16 %v105
    %v250 = vunpack.c.l.b16 %v106
    %v251 = vunpack.c.l.b16 %v107
    %v252 = vunpack.c.l.b16 %v108
    %v253 = vunpack.c.l.b16 %v109
    %v254 = vunpack.c.l.b16 %v110
    %v255 = vunpack.c.l.b16 %v111
    %v256 = vunpack.c.l.b16 %v112
    %v257 = vunpack.c.l.b16 %v113
    %v258 = vunpack.c.l.b16 %v114
    %v259 = vunpack.c.l.b16 %v115
    %v260 = vunpack.c.l.b16 %v116
    %v261 = vunpack.c.l.b16 %v117
    %v262 = vunpack.c.l.b16 %v118
    %v263 = vunpack.c.l.b16 %v119
    %v264 = vunpack.c.l.b16 %v120
    %v265 = vunpack.c.l.b16 %v121
    %v266 = vunpack.c.l.b16 %v122
    %v267 = vunpack.c.l.b16 %v123
    %v268 = vunpack.c.l.b16 %v124
    %v269 = vunpack.c.l.b16 %v125
    %v270 = vunpack.c.l.b16 %v126
    %v271 = vunpack.c.l.b16 %v127
    %v272 = vunpack.c.l.b16 %v128
    %v273 = vunpack.c.l.b16 %v129
    %v274 = vunpack.c.l.b16 %v130
    %v275 = vpack.c.b16 %v244, %v243
    %v276 = vpack.c.b16 %v246, %v245
    %v277 = vpack.c.b16 %v248, %v247
    %v278 = vpack.c.b16 %v250, %v249
    %v279 = vpack.c.b16 %v252, %v251
    %v280 = vpack.c.b16 %v254, %v253
    %v281 = vpack.c.b16 %v256, %v255
    %v282 = vpack.c.b16 %v258, %v257
    %v283 = vpack.c.b16 %v260, %v259
    %v284 = vpack.c.b16 %v262, %v261
    %v285 = vpack.c.b16 %v264, %v263
    %v286 = vpack.c.b16 %v266, %v265
    %v287 = vpack.c.b16 %v268, %v267
    %v288 = vpack.c.b16 %v270, %v269
    %v289 = vpack.c.b16 %v272, %v271
    %v290 = vpack.c.b16 %v274, %v273
    %307 = vmatprep.subr.bf16.mxu0 0
    %308 = vmatpush1.bf16.msra.mxu0 %v275
    %309 = vmatprep.subr.bf16.mxu0 0
    %310 = vmatpush1.bf16.msra.mxu0 %v276
    %311 = vmatprep.subr.bf16.mxu0 0
    %312 = vmatpush1.bf16.msra.mxu0 %v277
    %313 = vmatprep.subr.bf16.mxu0 0
    %314 = vmatpush1.bf16.msra.mxu0 %v278
    %315 = vmatprep.subr.bf16.mxu0 0
    %316 = vmatpush1.bf16.msra.mxu0 %v279
    %317 = vmatprep.subr.bf16.mxu0 0
    %318 = vmatpush1.bf16.msra.mxu0 %v280
    %319 = vmatprep.subr.bf16.mxu0 0
    %320 = vmatpush1.bf16.msra.mxu0 %v281
    %321 = vmatprep.subr.bf16.mxu0 0
    %322 = vmatpush1.bf16.msra.mxu0 %v282
    %323 = vmatprep.subr.bf16.mxu0 0
    %324 = vmatpush1.bf16.msra.mxu0 %v283
    %325 = vmatprep.subr.bf16.mxu0 0
    %326 = vmatpush1.bf16.msra.mxu0 %v284
    %327 = vmatprep.subr.bf16.mxu0 0
    %328 = vmatpush1.bf16.msra.mxu0 %v285
    %329 = vmatprep.subr.bf16.mxu0 0
    %330 = vmatpush1.bf16.msra.mxu0 %v286
    %331 = vmatprep.subr.bf16.mxu0 0
    %332 = vmatpush1.bf16.msra.mxu0 %v287
    %333 = vmatprep.subr.bf16.mxu0 0
    %334 = vmatpush1.bf16.msra.mxu0 %v288
    %335 = vmatprep.subr.bf16.mxu0 0
    %336 = vmatpush1.bf16.msra.mxu0 %v289
    %337 = vmatprep.subr.bf16.mxu0 0
    %338 = vmatpush1.bf16.msra.mxu0 %v290
    %339 = vmatprep.mubr.bf16.mxu0 %v180
    %340 = vmatmul.mubr.bf16.gmra.mrb[0].mxu0 %v179
    %v341 = vpop.f32.mrb[0].mxu0
    %v342 = vadd.f32 0.0, %v341
    %v343 = vpop.f32.mrb[0].mxu0
    %v344 = vpop.f32.mrb[0].mxu0
    %v345 = vadd.f32 0.0, %v344
    %v346 = vpop.f32.mrb[0].mxu0
    %347 = vmatprep.mubr.bf16.mxu0 %v182
    %348 = vmatmul.mubr.bf16.gmra.mrb[0].mxu0 %v181
    %v349 = vpop.f32.mrb[0].mxu0
    %v350 = vadd.f32 0.0, %v349
    %v351 = vpop.f32.mrb[0].mxu0
    %v352 = vpop.f32.mrb[0].mxu0
    %v353 = vadd.f32 0.0, %v352
    %v354 = vpop.f32.mrb[0].mxu0
    %355 = vmatprep.mubr.bf16.mxu0 %v184
    %356 = vmatmul.mubr.bf16.gmra.mrb[0].mxu0 %v183
    %v357 = vpop.f32.mrb[0].mxu0
    %v358 = vadd.f32 0.0, %v357
    %v359 = vpop.f32.mrb[0].mxu0
    %v360 = vpop.f32.mrb[0].mxu0
    %v361 = vadd.f32 0.0, %v360
    %v362 = vpop.f32.mrb[0].mxu0
    %363 = vmatprep.mubr.bf16.mxu0 %v186
    %364 = vmatmul.mubr.bf16.gmra.mrb[0].mxu0 %v185
    %v365 = vpop.f32.mrb[0].mxu0
    %v366 = vadd.f32 0.0, %v365
    %v367 = vpop.f32.mrb[0].mxu0
    %v368 = vpop.f32.mrb[0].mxu0
    %v369 = vadd.f32 0.0, %v368
    %v370 = vpop.f32.mrb[0].mxu0
    %371 = vmatprep.mubr.bf16.mxu0 %v188
    %372 = vmatmul.mubr.bf16.gmra.mrb[0].mxu0 %v187
    %v373 = vpop.f32.mrb[0].mxu0
    %v374 = vadd.f32 0.0, %v373
    %v375 = vpop.f32.mrb[0].mxu0
    %v376 = vpop.f32.mrb[0].mxu0
    %v377 = vadd.f32 0.0, %v376
    %v378 = vpop.f32.mrb[0].mxu0
    %379 = vmatprep.mubr.bf16.mxu0 %v190
    %380 = vmatmul.mubr.bf16.gmra.mrb[0].mxu0 %v189
    %v381 = vpop.f32.mrb[0].mxu0
    %v382 = vadd.f32 0.0, %v381
    %v383 = vpop.f32.mrb[0].mxu0
    %v384 = vpop.f32.mrb[0].mxu0
    %v385 = vadd.f32 0.0, %v384
    %v386 = vpop.f32.mrb[0].mxu0
    %387 = vmatprep.mubr.bf16.mxu0 %v192
    %388 = vmatmul.mubr.bf16.gmra.mrb[0].mxu0 %v191
    %v389 = vpop.f32.mrb[0].mxu0
    %v390 = vadd.f32 0.0, %v389
    %v391 = vpop.f32.mrb[0].mxu0
    %v392 = vpop.f32.mrb[0].mxu0
    %v393 = vadd.f32 0.0, %v392
    %v394 = vpop.f32.mrb[0].mxu0
    %395 = vmatprep.mubr.bf16.mxu0 %v194
    %396 = vmatmul.mubr.bf16.gmra.mrb[0].mxu0 %v193
    %v397 = vpop.f32.mrb[0].mxu0
    %v398 = vadd.f32 0.0, %v397
    %v399 = vpop.f32.mrb[0].mxu0
    %v400 = vpop.f32.mrb[0].mxu0
    %v401 = vadd.f32 0.0, %v400
    %v402 = vpop.f32.mrb[0].mxu0
    %403 = vdwg.mxu0
    %v404 = vadd.f32 %v67, %v342
    %v405 = vadd.f32 %v68, %v345
    %v406 = vadd.f32 %v69, %v350
    %v407 = vadd.f32 %v70, %v353
    %v408 = vadd.f32 %v71, %v358
    %v409 = vadd.f32 %v72, %v361
    %v410 = vadd.f32 %v73, %v366
    %v411 = vadd.f32 %v74, %v369
    %v412 = vadd.f32 %v75, %v374
    %v413 = vadd.f32 %v76, %v377
    %v414 = vadd.f32 %v77, %v382
    %v415 = vadd.f32 %v78, %v385
    %v416 = vadd.f32 %v79, %v390
    %v417 = vadd.f32 %v80, %v393
    %v418 = vadd.f32 %v81, %v398
    %v419 = vadd.f32 %v82, %v401
    %420 = vst [vmem:[#allocation2] sm:$0xff] %v404
    %421 = vst [vmem:[#allocation2 + $0x8] sm:$0xff] %v405
    %422 = vst [vmem:[#allocation2 + $0x10] sm:$0xff] %v406
    %423 = vst [vmem:[#allocation2 + $0x18] sm:$0xff] %v407
    %424 = vst [vmem:[#allocation2 + $0x20] sm:$0xff] %v408
    %425 = vst [vmem:[#allocation2 + $0x28] sm:$0xff] %v409
    %426 = vst [vmem:[#allocation2 + $0x30] sm:$0xff] %v410
    %427 = vst [vmem:[#allocation2 + $0x38] sm:$0xff] %v411
    %428 = vst [vmem:[#allocation2 + $0x40] sm:$0xff] %v412
    %429 = vst [vmem:[#allocation2 + $0x48] sm:$0xff] %v413
    %430 = vst [vmem:[#allocation2 + $0x50] sm:$0xff] %v414
    %431 = vst [vmem:[#allocation2 + $0x58] sm:$0xff] %v415
    %432 = vst [vmem:[#allocation2 + $0x60] sm:$0xff] %v416
    %433 = vst [vmem:[#allocation2 + $0x68] sm:$0xff] %v417
    %434 = vst [vmem:[#allocation2 + $0x70] sm:$0xff] %v418
    %435 = vst [vmem:[#allocation2 + $0x78] sm:$0xff] %v419
    // Predicated region
    $region30: #{tpu_custom_call.1} parent=1 // pred_check
      %p436 = pneg %p47
    $region31: #{tpu_custom_call.1} parent=1 // pred_check_branch
      %438 = sbr.rel (%p436) target = $region33
    $region32: #{tpu_custom_call.1} parent=1 // pred_region
      %v439 = vld [vmem:[#allocation2] sm:$0xff]
      %v440 = vld [vmem:[#allocation2 + $0x8] sm:$0xff]
      %v441 = vld [vmem:[#allocation2 + $0x10] sm:$0xff]
      %v442 = vld [vmem:[#allocation2 + $0x18] sm:$0xff]
      %v443 = vld [vmem:[#allocation2 + $0x20] sm:$0xff]
      %v444 = vld [vmem:[#allocation2 + $0x28] sm:$0xff]
      %v445 = vld [vmem:[#allocation2 + $0x30] sm:$0xff]
      %v446 = vld [vmem:[#allocation2 + $0x38] sm:$0xff]
      %v447 = vld [vmem:[#allocation2 + $0x40] sm:$0xff]
      %v448 = vld [vmem:[#allocation2 + $0x48] sm:$0xff]
      %v449 = vld [vmem:[#allocation2 + $0x50] sm:$0xff]
      %v450 = vld [vmem:[#allocation2 + $0x58] sm:$0xff]
      %v451 = vld [vmem:[#allocation2 + $0x60] sm:$0xff]
      %v452 = vld [vmem:[#allocation2 + $0x68] sm:$0xff]
      %v453 = vld [vmem:[#allocation2 + $0x70] sm:$0xff]
      %v454 = vld [vmem:[#allocation2 + $0x78] sm:$0xff]
      %v455 = vld [vmem:[%s2] sm:$0x1]
      %v457 = vlaneseq
      %v458 = vshrl.u32 %v457, 7
      %v459 = vsub.s32 0, %v458
      %v460 = vrot.slane %v455, %v459
      %v462 = vmul.f32 %v439, %v460
      %v463 = vmul.f32 %v440, %v460
      %v464 = vmul.f32 %v441, %v460
      %v465 = vmul.f32 %v442, %v460
      %v466 = vmul.f32 %v443, %v460
      %v467 = vmul.f32 %v444, %v460
      %v468 = vmul.f32 %v445, %v460
      %v469 = vmul.f32 %v446, %v460
      %v470 = vmul.f32 %v447, %v460
      %v471 = vmul.f32 %v448, %v460
      %v472 = vmul.f32 %v449, %v460
      %v473 = vmul.f32 %v450, %v460
      %v474 = vmul.f32 %v451, %v460
      %v475 = vmul.f32 %v452, %v460
      %v476 = vmul.f32 %v453, %v460
      %v477 = vmul.f32 %v454, %v460
      %v478 = vld [vmem:[%s3] sm:$0x1]
      %v480 = vlaneseq
      %v481 = vshrl.u32 %v480, 7
      %v482 = vsub.s32 0, %v481
      %v483 = vrot.slane %v478, %v482
      %v485 = vadd.f32 %v462, %v483
      %v486 = vadd.f32 %v463, %v483
      %v487 = vadd.f32 %v464, %v483
      %v488 = vadd.f32 %v465, %v483
      %v489 = vadd.f32 %v466, %v483
      %v490 = vadd.f32 %v467, %v483
      %v491 = vadd.f32 %v468, %v483
      %v492 = vadd.f32 %v469, %v483
      %v493 = vadd.f32 %v470, %v483
      %v494 = vadd.f32 %v471, %v483
      %v495 = vadd.f32 %v472, %v483
      %v496 = vadd.f32 %v473, %v483
      %v497 = vadd.f32 %v474, %v483
      %v498 = vadd.f32 %v475, %v483
      %v499 = vadd.f32 %v476, %v483
      %v500 = vadd.f32 %v477, %v483
      %v501 = vmax.f32 %v485, 0.0
      %v502 = vmax.f32 %v486, 0.0
      %v503 = vmax.f32 %v487, 0.0
      %v504 = vmax.f32 %v488, 0.0
      %v505 = vmax.f32 %v489, 0.0
      %v506 = vmax.f32 %v490, 0.0
      %v507 = vmax.f32 %v491, 0.0
      %v508 = vmax.f32 %v492, 0.0
      %v509 = vmax.f32 %v493, 0.0
      %v510 = vmax.f32 %v494, 0.0
      %v511 = vmax.f32 %v495, 0.0
      %v512 = vmax.f32 %v496, 0.0
      %v513 = vmax.f32 %v497, 0.0
      %v514 = vmax.f32 %v498, 0.0
      %v515 = vmax.f32 %v499, 0.0
      %v516 = vmax.f32 %v500, 0.0
      %v517 = vpack.c.bf16 %v502, %v501
      %v518 = vpack.c.bf16 %v504, %v503
      %v519 = vpack.c.bf16 %v506, %v505
      %v520 = vpack.c.bf16 %v508, %v507
      %v521 = vpack.c.bf16 %v510, %v509
      %v522 = vpack.c.bf16 %v512, %v511
      %v523 = vpack.c.bf16 %v514, %v513
      %v524 = vpack.c.bf16 %v516, %v515
      %v533 = vunpack.c.l.b16 %v517
      %v534 = vunpack.c.h.b16 %v517
      %v535 = vunpack.c.l.b16 %v518
      %v536 = vunpack.c.h.b16 %v518
      %v537 = vunpack.c.l.b16 %v519
      %v538 = vunpack.c.h.b16 %v519
      %v539 = vunpack.c.l.b16 %v520
      %v540 = vunpack.c.h.b16 %v520
      %v541 = vunpack.c.l.b16 %v521
      %v542 = vunpack.c.h.b16 %v521
      %v543 = vunpack.c.l.b16 %v522
      %v544 = vunpack.c.h.b16 %v522
      %v545 = vunpack.c.l.b16 %v523
      %v546 = vunpack.c.h.b16 %v523
      %v547 = vunpack.c.l.b16 %v524
      %v548 = vunpack.c.h.b16 %v524
      %v549 = vpack.c.b16 %v533, %v533
      %v550 = vpack.c.b16 %v534, %v534
      %v551 = vpack.c.b16 %v535, %v535
      %v552 = vpack.c.b16 %v536, %v536
      %v553 = vpack.c.b16 %v537, %v537
      %v554 = vpack.c.b16 %v538, %v538
      %v555 = vpack.c.b16 %v539, %v539
      %v556 = vpack.c.b16 %v540, %v540
      %v557 = vpack.c.b16 %v541, %v541
      %v558 = vpack.c.b16 %v542, %v542
      %v559 = vpack.c.b16 %v543, %v543
      %v560 = vpack.c.b16 %v544, %v544
      %v561 = vpack.c.b16 %v545, %v545
      %v562 = vpack.c.b16 %v546, %v546
      %v563 = vpack.c.b16 %v547, %v547
      %v564 = vpack.c.b16 %v548, %v548
      %581 = vst [vmem:[#allocation8] sm:$0xf] %v549
      %582 = vst [vmem:[#allocation8 + $0x4] sm:$0xf] %v550
      %583 = vst [vmem:[#allocation8 + $0x8] sm:$0xf] %v551
      %584 = vst [vmem:[#allocation8 + $0xc] sm:$0xf] %v552
      %585 = vst [vmem:[#allocation8 + $0x10] sm:$0xf] %v553
      %586 = vst [vmem:[#allocation8 + $0x14] sm:$0xf] %v554
      %587 = vst [vmem:[#allocation8 + $0x18] sm:$0xf] %v555
      %588 = vst [vmem:[#allocation8 + $0x1c] sm:$0xf] %v556
      %589 = vst [vmem:[#allocation8 + $0x20] sm:$0xf] %v557
      %590 = vst [vmem:[#allocation8 + $0x24] sm:$0xf] %v558
      %591 = vst [vmem:[#allocation8 + $0x28] sm:$0xf] %v559
      %592 = vst [vmem:[#allocation8 + $0x2c] sm:$0xf] %v560
      %593 = vst [vmem:[#allocation8 + $0x30] sm:$0xf] %v561
      %594 = vst [vmem:[#allocation8 + $0x34] sm:$0xf] %v562
      %595 = vst [vmem:[#allocation8 + $0x38] sm:$0xf] %v563
      %596 = vst [vmem:[#allocation8 + $0x3c] sm:$0xf] %v564
    $region33: #{tpu_custom_call.1} parent=1 // pred_fallthru
      _
    // Predicated region
    $region34: #{tpu_custom_call.1} parent=1 // pred_check
      _
    $region35: #{tpu_custom_call.1} parent=1 // pred_check_branch
      %598 = sbr.rel (0) target = $region37
    $region36: #{tpu_custom_call.1} parent=1 // pred_region
      %s600 = ssub.s32 1024, 1024
      %601 = vsyncadd [#allocation5], %s600
      %s602 = sshll.u32 [#allocation8], 4
      %s603 = int_to_ptr.vmem [resolvable:$true] %s602
      %608 = dma.vmem_to_hbm [thread:$0]  %s603, 1024, %s4, [#allocation5], 64, 64, 4
    $region37: #{tpu_custom_call.1} parent=1 // pred_fallthru
      _
    // Predicated region
    $region38: #{tpu_custom_call.1} parent=1 // pred_check
      _
    $region39: #{tpu_custom_call.1} parent=1 // pred_check_branch
      %610 = sbr.rel (0) target = $region41
    $region40: #{tpu_custom_call.1} parent=1 // pred_region
      %611 = dma.done [#allocation5], 1024
    $region41: #{tpu_custom_call.1} parent=1 // pred_fallthru
      _
    %612 = vsyncpa [#allocation4], 1
    %613 = vsyncpa [#allocation7], 1
    %614 = vsyncpa [#allocation5], 1

</llo_original>
